<compile_context>
chip_gen: v7x
topology: tpu7x:2x2x1
jax: 0.10.0
libtpu: 0.0.40
codegen_flags: <defaults>
</compile_context>

<pallas_src>
import jax
import jax.numpy as jnp
from jax.experimental import pallas as pl
from jax.experimental.pallas import tpu as pltpu


def _mlp_kernel(x_ref, w1_ref, b1_ref, w2_ref, b2_ref, wo_ref, bo_ref, o_ref):
    # Hidden layer 1: bf16 matmul on the MXU, f32 accumulate, f32 bias + ReLU.
    h = jnp.dot(x_ref[...], w1_ref[...], preferred_element_type=jnp.float32)
    h = jnp.maximum(h + b1_ref[...], 0.0)
    # Hidden layer 2.
    h = jnp.dot(h.astype(jnp.bfloat16), w2_ref[...],
                preferred_element_type=jnp.float32)
    h = jnp.maximum(h + b2_ref[...], 0.0)
    # Output head (no activation).
    out = jnp.dot(h.astype(jnp.bfloat16), wo_ref[...],
                  preferred_element_type=jnp.float32)
    o_ref[...] = (out + bo_ref[...]).astype(o_ref.dtype)


def mlp_forward(x, params, *, block_m=1024):
    """Fused MLP forward pass.

    x:       [N, inputs_dim] float32
    params:  dict with w1 [F,W], b1 [1,W], w2 [W,W], b2 [1,W], wo [W,3], bo [1,3]
    returns: [N, 3] float32
    """
    n, f = x.shape
    w = params["w1"].shape[1]
    out_dim = params["wo"].shape[1]

    # Batch tile: multiple of 8 sublanes, no larger than the (8-aligned) batch.
    block_m = max(8, min(int(block_m), pl.cdiv(n, 8) * 8))
    block_m = pl.cdiv(block_m, 8) * 8

    # Ragged last tile is masked by Pallas -- no host-side jnp.pad copy of x.
    grid = (pl.cdiv(n, block_m),)

    # bf16 activations / weights; biases stay f32 (added post-accumulation).
    x_bf = x.astype(jnp.bfloat16)
    w1 = params["w1"].astype(jnp.bfloat16)
    w2 = params["w2"].astype(jnp.bfloat16)
    wo = params["wo"].astype(jnp.bfloat16)
    b1 = params["b1"].astype(jnp.float32)
    b2 = params["b2"].astype(jnp.float32)
    bo = params["bo"].astype(jnp.float32)

    full = lambda shape: pl.BlockSpec(shape, lambda i: (0, 0))

    cost = pl.CostEstimate(
        flops=2 * n * (f * w + w * w + w * out_dim),
        transcendentals=0,
        bytes_accessed=(n * f * 2 + n * out_dim * 4              # x (bf16) + out (f32)
                        + (f * w + w * w + w * out_dim) * 2      # weights (bf16)
                        + (2 * w + out_dim) * 4),                # biases (f32)
    )

    out = pl.pallas_call(
        _mlp_kernel,
        out_shape=jax.ShapeDtypeStruct((n, out_dim), jnp.float32),
        grid_spec=pltpu.PrefetchScalarGridSpec(
            num_scalar_prefetch=0,
            grid=grid,
            in_specs=[
                pl.BlockSpec((block_m, f), lambda i: (i, 0)),   # x tile (bf16)
                full((f, w)),                                   # w1 (resident)
                full((1, w)),                                   # b1
                full((w, w)),                                   # w2
                full((1, w)),                                   # b2
                full((w, out_dim)),                             # wo
                full((1, out_dim)),                             # bo
            ],
            out_specs=pl.BlockSpec((block_m, out_dim), lambda i: (i, 0)),
        ),
        compiler_params=pltpu.CompilerParams(
            dimension_semantics=("parallel",),                  # megacore on v7x
            vmem_limit_bytes=32 * 1024 * 1024,                  # headroom, <= 64 MiB v7x
        ),
        cost_estimate=cost,
    )(x_bf, w1, b1, w2, b2, wo, bo)

    return out


def init_params(key, inputs_dim, mlp_w, out_dim=3):
    """Deterministic parameter init (uniform, PyTorch-Linear-like fan_in scale)."""
    ks = jax.random.split(key, 6)

    def linear_init(kw, kb, fan_in, fan_out):
        bound = 1.0 / jnp.sqrt(fan_in)
        w = jax.random.uniform(kw, (fan_in, fan_out), jnp.float32, -bound, bound)
        b = jax.random.uniform(kb, (1, fan_out), jnp.float32, -bound, bound)
        return w, b

    w1, b1 = linear_init(ks[0], ks[1], inputs_dim, mlp_w)
    w2, b2 = linear_init(ks[2], ks[3], mlp_w, mlp_w)
    wo, bo = linear_init(ks[4], ks[5], mlp_w, out_dim)
    return {"w1": w1, "b1": b1, "w2": w2, "b2": b2, "wo": wo, "bo": bo}


def mlp_reference(x, p):
    """Pure-JAX reference mirroring the kernel's bf16-weight / f32-accumulate math."""
    bf = jnp.bfloat16
    h = jnp.dot(x.astype(bf), p["w1"].astype(bf),
                preferred_element_type=jnp.float32)
    h = jnp.maximum(h + p["b1"], 0.0)
    h = jnp.dot(h.astype(bf), p["w2"].astype(bf),
                preferred_element_type=jnp.float32)
    h = jnp.maximum(h + p["b2"], 0.0)
    out = jnp.dot(h.astype(bf), p["wo"].astype(bf),
                  preferred_element_type=jnp.float32)
    return out + p["bo"]


if __name__ == "__main__":
    # Module config (mirrors MLP.__init__)
    sh_degree = 3              # unused by forward
    mlp_W = 32
    mlp_D = 3                  # -> D = 2 hidden layers
    use_hg = False
    encoding_dims = 0
    inputs_dim = 1 + 3 * 2 + 1 + 3   # distance + viewdir*2 + cos + color = 11
    if use_hg:
        inputs_dim += encoding_dims

    key = jax.random.PRNGKey(0)
    kx, kp = jax.random.split(key)

    batch = 200                # small batch of rays (not tile-aligned on purpose)
    x = jax.random.normal(kx, (batch, inputs_dim), jnp.float32)
    params = init_params(kp, inputs_dim, mlp_W)

    y = mlp_forward(x, params)
    y = jax.block_until_ready(y)

    # sanity check against pure-JAX reference (same bf16 weight precision)
    y_ref = mlp_reference(x, params)
    assert y.shape == (batch, 3)
    assert jnp.allclose(y, y_ref, atol=2e-3, rtol=2e-3)

    print("KERNEL_OK")
</pallas_src>

<mosaic_0001>
module attributes {stable_mosaic.version = 11 : i64} {
  func.func @_mlp_kernel(%arg0: i32, %arg1: memref<200x11xbf16, #tpu.memory_space<vmem>>, %arg2: memref<11x32xbf16, #tpu.memory_space<vmem>>, %arg3: memref<1x32xf32, #tpu.memory_space<vmem>>, %arg4: memref<32x32xbf16, #tpu.memory_space<vmem>>, %arg5: memref<1x32xf32, #tpu.memory_space<vmem>>, %arg6: memref<32x3xbf16, #tpu.memory_space<vmem>>, %arg7: memref<1x3xf32, #tpu.memory_space<vmem>>, %arg8: memref<200x3xf32, #tpu.memory_space<vmem>>) attributes {dimension_semantics = [#tpu.dimension_semantics<parallel>], iteration_bounds = array<i64: 1>, scalar_prefetch = 0 : i64, scratch_operands = 0 : i64, tpu.core_type = #tpu.core_type<tc>, window_params = [{transform_indices = @transform_0, window_bounds = array<i64: 200, 11>}, {pipeline_mode = #tpu.pipeline_mode<synchronous>, transform_indices = @transform_1, window_bounds = array<i64: 11, 32>}, {pipeline_mode = #tpu.pipeline_mode<synchronous>, transform_indices = @transform_2, window_bounds = array<i64: 1, 32>}, {pipeline_mode = #tpu.pipeline_mode<synchronous>, transform_indices = @transform_3, window_bounds = array<i64: 32, 32>}, {pipeline_mode = #tpu.pipeline_mode<synchronous>, transform_indices = @transform_4, window_bounds = array<i64: 1, 32>}, {pipeline_mode = #tpu.pipeline_mode<synchronous>, transform_indices = @transform_5, window_bounds = array<i64: 32, 3>}, {pipeline_mode = #tpu.pipeline_mode<synchronous>, transform_indices = @transform_6, window_bounds = array<i64: 1, 3>}, {transform_indices = @transform_7, window_bounds = array<i64: 200, 3>}]} {
    %c0 = arith.constant 0 : index
    %c0_0 = arith.constant 0 : index
    %0 = vector.load %arg1[%c0, %c0_0] : memref<200x11xbf16, #tpu.memory_space<vmem>>, vector<200x11xbf16>
    %c0_1 = arith.constant 0 : index
    %c0_2 = arith.constant 0 : index
    %1 = vector.load %arg2[%c0_1, %c0_2] : memref<11x32xbf16, #tpu.memory_space<vmem>>, vector<11x32xbf16>
    %cst = arith.constant dense<0.000000e+00> : vector<200x32xf32>
    %2 = tpu.matmul %0, %1, %cst {dimension_numbers = #tpu.dot_dimension_numbers<[1], [0], [0], [1], [0, 0, 1, 1], [], []>} : vector<200x11xbf16>, vector<11x32xbf16>, vector<200x32xf32> -> vector<200x32xf32>
    %c0_3 = arith.constant 0 : index
    %c0_4 = arith.constant 0 : index
    %3 = vector.load %arg3[%c0_3, %c0_4] : memref<1x32xf32, #tpu.memory_space<vmem>>, vector<1x32xf32>
    %4 = vector.broadcast %3 : vector<1x32xf32> to vector<200x32xf32>
    %5 = arith.addf %2, %4 : vector<200x32xf32>
    %cst_5 = arith.constant 0.000000e+00 : f32
    %6 = vector.broadcast %cst_5 : f32 to vector<200x32xf32>
    %7 = arith.maximumf %5, %6 : vector<200x32xf32>
    %8 = arith.truncf %7 : vector<200x32xf32> to vector<200x32xbf16>
    %c0_6 = arith.constant 0 : index
    %c0_7 = arith.constant 0 : index
    %9 = vector.load %arg4[%c0_6, %c0_7] : memref<32x32xbf16, #tpu.memory_space<vmem>>, vector<32x32xbf16>
    %cst_8 = arith.constant dense<0.000000e+00> : vector<200x32xf32>
    %10 = tpu.matmul %8, %9, %cst_8 {dimension_numbers = #tpu.dot_dimension_numbers<[1], [0], [0], [1], [0, 0, 1, 1], [], []>} : vector<200x32xbf16>, vector<32x32xbf16>, vector<200x32xf32> -> vector<200x32xf32>
    %c0_9 = arith.constant 0 : index
    %c0_10 = arith.constant 0 : index
    %11 = vector.load %arg5[%c0_9, %c0_10] : memref<1x32xf32, #tpu.memory_space<vmem>>, vector<1x32xf32>
    %12 = vector.broadcast %11 : vector<1x32xf32> to vector<200x32xf32>
    %13 = arith.addf %10, %12 : vector<200x32xf32>
    %cst_11 = arith.constant 0.000000e+00 : f32
    %14 = vector.broadcast %cst_11 : f32 to vector<200x32xf32>
    %15 = arith.maximumf %13, %14 : vector<200x32xf32>
    %16 = arith.truncf %15 : vector<200x32xf32> to vector<200x32xbf16>
    %c0_12 = arith.constant 0 : index
    %c0_13 = arith.constant 0 : index
    %17 = vector.load %arg6[%c0_12, %c0_13] : memref<32x3xbf16, #tpu.memory_space<vmem>>, vector<32x3xbf16>
    %cst_14 = arith.constant dense<0.000000e+00> : vector<200x3xf32>
    %18 = tpu.matmul %16, %17, %cst_14 {dimension_numbers = #tpu.dot_dimension_numbers<[1], [0], [0], [1], [0, 0, 1, 1], [], []>} : vector<200x32xbf16>, vector<32x3xbf16>, vector<200x3xf32> -> vector<200x3xf32>
    %c0_15 = arith.constant 0 : index
    %c0_16 = arith.constant 0 : index
    %19 = vector.load %arg7[%c0_15, %c0_16] : memref<1x3xf32, #tpu.memory_space<vmem>>, vector<1x3xf32>
    %20 = vector.broadcast %19 : vector<1x3xf32> to vector<200x3xf32>
    %21 = arith.addf %18, %20 : vector<200x3xf32>
    %c0_17 = arith.constant 0 : index
    %c0_18 = arith.constant 0 : index
    %22 = vector.load %arg8[%c0_17, %c0_18] : memref<200x3xf32, #tpu.memory_space<vmem>>, vector<200x3xf32>
    tpu.vector_store %arg8[%c0_17, %c0_18], %21 {strides = array<i32>} : memref<200x3xf32, #tpu.memory_space<vmem>>, vector<200x3xf32>,
    return
  }
  func.func @transform_0(%arg0: i32) -> (i32, i32) {
    %c0_i32 = arith.constant 0 : i32
    %c0_i32_0 = arith.constant 0 : i32
    return %arg0, %c0_i32 : i32, i32
  }
  func.func @transform_1(%arg0: i32) -> (i32, i32) {
    %c0_i32 = arith.constant 0 : i32
    %c0_i32_0 = arith.constant 0 : i32
    %c0_i32_1 = arith.constant 0 : i32
    return %c0_i32, %c0_i32_0 : i32, i32
  }
  func.func @transform_2(%arg0: i32) -> (i32, i32) {
    %c0_i32 = arith.constant 0 : i32
    %c0_i32_0 = arith.constant 0 : i32
    %c0_i32_1 = arith.constant 0 : i32
    return %c0_i32, %c0_i32_0 : i32, i32
  }
  func.func @transform_3(%arg0: i32) -> (i32, i32) {
    %c0_i32 = arith.constant 0 : i32
    %c0_i32_0 = arith.constant 0 : i32
    %c0_i32_1 = arith.constant 0 : i32
    return %c0_i32, %c0_i32_0 : i32, i32
  }
  func.func @transform_4(%arg0: i32) -> (i32, i32) {
    %c0_i32 = arith.constant 0 : i32
    %c0_i32_0 = arith.constant 0 : i32
    %c0_i32_1 = arith.constant 0 : i32
    return %c0_i32, %c0_i32_0 : i32, i32
  }
  func.func @transform_5(%arg0: i32) -> (i32, i32) {
    %c0_i32 = arith.constant 0 : i32
    %c0_i32_0 = arith.constant 0 : i32
    %c0_i32_1 = arith.constant 0 : i32
    return %c0_i32, %c0_i32_0 : i32, i32
  }
  func.func @transform_6(%arg0: i32) -> (i32, i32) {
    %c0_i32 = arith.constant 0 : i32
    %c0_i32_0 = arith.constant 0 : i32
    %c0_i32_1 = arith.constant 0 : i32
    return %c0_i32, %c0_i32_0 : i32, i32
  }
  func.func @transform_7(%arg0: i32) -> (i32, i32) {
    %c0_i32 = arith.constant 0 : i32
    %c0_i32_0 = arith.constant 0 : i32
    return %arg0, %c0_i32 : i32, i32
  }
}

</mosaic_0001>

<llo_original>
// kernel: tpu_custom_call.1
$region0: #{tpu_custom_call.1}
  #allocation0 [shape = 'u32[]', space=smem, size = 0x4, offset = 0x4, fixed_abs, tag = 'smem constant byte address 0x4 - core index']
  #allocation1 [shape = 'u32[144,128]{1,0:T(1,128)}', space=vmem, size = 0x12000, scoped, tag = 'internal scratch']
  %s0 = inlined_call_operand.vmem [shape: bf16[200,11], index: 0, kind: input, shape index: {}]
  %s1 = inlined_call_operand.vmem [shape: bf16[11,32], index: 1, kind: input, shape index: {}]
  %s2 = inlined_call_operand.vmem [shape: f32[1,32], index: 2, kind: input, shape index: {}]
  %s3 = inlined_call_operand.vmem [shape: bf16[32,32], index: 3, kind: input, shape index: {}]
  %s4 = inlined_call_operand.vmem [shape: f32[1,32], index: 4, kind: input, shape index: {}]
  %s5 = inlined_call_operand.vmem [shape: bf16[32,3], index: 5, kind: input, shape index: {}]
  %s6 = inlined_call_operand.vmem [shape: f32[1,3], index: 6, kind: input, shape index: {}]
  %s7 = inlined_call_operand.vmem [shape: f32[200,3], index: 7, kind: output, shape index: {}]
  %s8 = sld [smem:[#allocation0]]
  $region38: #{tpu_custom_call.1} parent=0
    _
  %s10 = ssub.s32 1, %s8
  %s11 = scalar_select 0, %s10, %s8
  // Predicated region
  $region2: #{tpu_custom_call.1} parent=0 // pred_check
    _
  $region3: #{tpu_custom_call.1} parent=0 // pred_check_branch
    %13 = sbr.rel (0) target = $region5
  $region4: #{tpu_custom_call.1} parent=0 // pred_region
    _
  $region5: #{tpu_custom_call.1} parent=0 // pred_fallthru
    _
  // Predicated region
  $region6: #{tpu_custom_call.1} parent=0 // pred_check
    _
  $region7: #{tpu_custom_call.1} parent=0 // pred_check_branch
    %15 = sbr.rel (0) target = $region9
  $region8: #{tpu_custom_call.1} parent=0 // pred_region
    _
  $region9: #{tpu_custom_call.1} parent=0 // pred_fallthru
    _
  // Predicated region
  $region10: #{tpu_custom_call.1} parent=0 // pred_check
    _
  $region11: #{tpu_custom_call.1} parent=0 // pred_check_branch
    %17 = sbr.rel (0) target = $region13
  $region12: #{tpu_custom_call.1} parent=0 // pred_region
    _
  $region13: #{tpu_custom_call.1} parent=0 // pred_fallthru
    _
  // Predicated region
  $region14: #{tpu_custom_call.1} parent=0 // pred_check
    _
  $region15: #{tpu_custom_call.1} parent=0 // pred_check_branch
    %19 = sbr.rel (0) target = $region17
  $region16: #{tpu_custom_call.1} parent=0 // pred_region
    _
  $region17: #{tpu_custom_call.1} parent=0 // pred_fallthru
    _
  // Predicated region
  $region18: #{tpu_custom_call.1} parent=0 // pred_check
    _
  $region19: #{tpu_custom_call.1} parent=0 // pred_check_branch
    %21 = sbr.rel (0) target = $region21
  $region20: #{tpu_custom_call.1} parent=0 // pred_region
    _
  $region21: #{tpu_custom_call.1} parent=0 // pred_fallthru
    _
  // Predicated region
  $region22: #{tpu_custom_call.1} parent=0 // pred_check
    _
  $region23: #{tpu_custom_call.1} parent=0 // pred_check_branch
    %23 = sbr.rel (0) target = $region25
  $region24: #{tpu_custom_call.1} parent=0 // pred_region
    _
  $region25: #{tpu_custom_call.1} parent=0 // pred_fallthru
    _
  // Predicated region
  $region26: #{tpu_custom_call.1} parent=0 // pred_check
    _
  $region27: #{tpu_custom_call.1} parent=0 // pred_check_branch
    %25 = sbr.rel (0) target = $region29
  $region28: #{tpu_custom_call.1} parent=0 // pred_region
    _
  $region29: #{tpu_custom_call.1} parent=0 // pred_fallthru
    _
  %v27 = vld [vmem:[%s0] sm:$0xf]
  %v28 = vld [vmem:[%s0 + $0x4] sm:$0xf]
  %v29 = vld [vmem:[%s0 + $0x8] sm:$0xf]
  %v30 = vld [vmem:[%s0 + $0xc] sm:$0xf]
  %v31 = vld [vmem:[%s0 + $0x10] sm:$0xf]
  %v32 = vld [vmem:[%s0 + $0x14] sm:$0xf]
  %v33 = vld [vmem:[%s0 + $0x18] sm:$0xf]
  %v34 = vld [vmem:[%s0 + $0x1c] sm:$0xf]
  %v35 = vld [vmem:[%s0 + $0x20] sm:$0xf]
  %v36 = vld [vmem:[%s0 + $0x24] sm:$0xf]
  %v37 = vld [vmem:[%s0 + $0x28] sm:$0xf]
  %v38 = vld [vmem:[%s0 + $0x2c] sm:$0xf]
  %v39 = vld [vmem:[%s0 + $0x30] sm:$0xf]
  %v40 = vld [vmem:[%s0 + $0x34] sm:$0xf]
  %v41 = vld [vmem:[%s0 + $0x38] sm:$0xf]
  %v42 = vld [vmem:[%s0 + $0x3c] sm:$0xf]
  %v43 = vld [vmem:[%s0 + $0x40] sm:$0xf]
  %v44 = vld [vmem:[%s0 + $0x44] sm:$0xf]
  %v45 = vld [vmem:[%s0 + $0x48] sm:$0xf]
  %v46 = vld [vmem:[%s0 + $0x4c] sm:$0xf]
  %v47 = vld [vmem:[%s0 + $0x50] sm:$0xf]
  %v48 = vld [vmem:[%s0 + $0x54] sm:$0xf]
  %v49 = vld [vmem:[%s0 + $0x58] sm:$0xf]
  %v50 = vld [vmem:[%s0 + $0x5c] sm:$0xf]
  %v51 = vld [vmem:[%s0 + $0x60] sm:$0xf]
  %v52 = vld [vmem:[%s1] sm:$0xf]
  %v53 = vld [vmem:[%s1 + $0x4] sm:$0x3]
  %v54 = vld [vmem:[%s2] sm:$0x1]
  %v56 = vlaneseq
  %v57 = vshrl.u32 %v56, 7
  %v58 = vsub.s32 0, %v57
  %v59 = vrot.slane %v54, %v58
  %v86 = vunpack.c.l.b16 %v27
  %v87 = vunpack.c.l.b16 %v28
  %v88 = vunpack.c.l.b16 %v29
  %v89 = vunpack.c.l.b16 %v30
  %v90 = vunpack.c.l.b16 %v31
  %v91 = vunpack.c.l.b16 %v32
  %v92 = vunpack.c.l.b16 %v33
  %v93 = vunpack.c.l.b16 %v34
  %v94 = vunpack.c.l.b16 %v35
  %v95 = vunpack.c.l.b16 %v36
  %v96 = vunpack.c.l.b16 %v37
  %v97 = vunpack.c.l.b16 %v38
  %v98 = vunpack.c.l.b16 %v39
  %v99 = vunpack.c.l.b16 %v40
  %v100 = vunpack.c.l.b16 %v41
  %v101 = vunpack.c.l.b16 %v42
  %v102 = vunpack.c.l.b16 %v43
  %v103 = vunpack.c.l.b16 %v44
  %v104 = vunpack.c.l.b16 %v45
  %v105 = vunpack.c.l.b16 %v46
  %v106 = vunpack.c.l.b16 %v47
  %v107 = vunpack.c.l.b16 %v48
  %v108 = vunpack.c.l.b16 %v49
  %v109 = vunpack.c.l.b16 %v50
  %v110 = vunpack.c.l.b16 %v51
  %v111 = vpack.c.b16 %v87, %v86
  %v112 = vpack.c.b16 %v89, %v88
  %v113 = vpack.c.b16 %v91, %v90
  %v114 = vpack.c.b16 %v93, %v92
  %v115 = vpack.c.b16 %v95, %v94
  %v116 = vpack.c.b16 %v97, %v96
  %v117 = vpack.c.b16 %v99, %v98
  %v118 = vpack.c.b16 %v101, %v100
  %v119 = vpack.c.b16 %v103, %v102
  %v120 = vpack.c.b16 %v105, %v104
  %v121 = vpack.c.b16 %v107, %v106
  %v122 = vpack.c.b16 %v109, %v108
  %v123 = vpack.c.b16 %v110, %v110
  %v126 = vunpack.c.l.b16 %v52
  %v127 = vunpack.c.l.b16 %v53
  %v128 = vpack.c.b16 %v127, %v126
  %vm129 = vcmask 89088
  %v131 = vsel %vm129, %v111, 0
  %v134 = vsel %vm129, %v112, 0
  %v137 = vsel %vm129, %v113, 0
  %v140 = vsel %vm129, %v114, 0
  %v143 = vsel %vm129, %v115, 0
  %v146 = vsel %vm129, %v116, 0
  %v149 = vsel %vm129, %v117, 0
  %v152 = vsel %vm129, %v118, 0
  %v155 = vsel %vm129, %v119, 0
  %v158 = vsel %vm129, %v120, 0
  %v161 = vsel %vm129, %v121, 0
  %v164 = vsel %vm129, %v122, 0
  %v167 = vsel %vm129, %v123, 0
  %vm169 = vcmask 1044480
  %vm170 = vcmask 1045504
  %v171 = vsel %vm169, 4294967295, 65535
  %v172 = vsel %vm170, %v171, 0
  %v174 = vand.u32 %v128, %v172
  %176 = vmatprep.subr.bf16.mxu0 0
  %177 = vmatpush1.bf16.msra.mxu0 %v174
  %178 = vmatprep.subr.bf16.mxu0 0
  %179 = vmatpush1.bf16.msra.mxu0 0
  %180 = vmatprep.subr.bf16.mxu0 0
  %181 = vmatpush1.bf16.msra.mxu0 0
  %182 = vmatprep.subr.bf16.mxu0 0
  %183 = vmatpush1.bf16.msra.mxu0 0
  %184 = vmatprep.subr.bf16.mxu0 0
  %185 = vmatpush1.bf16.msra.mxu0 0
  %186 = vmatprep.subr.bf16.mxu0 0
  %187 = vmatpush1.bf16.msra.mxu0 0
  %188 = vmatprep.subr.bf16.mxu0 0
  %189 = vmatpush1.bf16.msra.mxu0 0
  %190 = vmatprep.subr.bf16.mxu0 0
  %191 = vmatpush1.bf16.msra.mxu0 0
  %192 = vmatprep.subr.bf16.mxu0 0
  %193 = vmatpush1.bf16.msra.mxu0 0
  %194 = vmatprep.subr.bf16.mxu0 0
  %195 = vmatpush1.bf16.msra.mxu0 0
  %196 = vmatprep.subr.bf16.mxu0 0
  %197 = vmatpush1.bf16.msra.mxu0 0
  %198 = vmatprep.subr.bf16.mxu0 0
  %199 = vmatpush1.bf16.msra.mxu0 0
  %200 = vmatprep.subr.bf16.mxu0 0
  %201 = vmatpush1.bf16.msra.mxu0 0
  %202 = vmatprep.subr.bf16.mxu0 0
  %203 = vmatpush1.bf16.msra.mxu0 0
  %204 = vmatprep.subr.bf16.mxu0 0
  %205 = vmatpush1.bf16.msra.mxu0 0
  %206 = vmatprep.subr.bf16.mxu0 0
  %207 = vmatpush1.bf16.msra.mxu0 0
  %208 = vmatprep.mubr.bf16.mxu0 0
  %209 = vmatmul.mubr.bf16.gmra.mrb[0].mxu0 %v131
  %v210 = vpop.f32.mrb[0].mxu0
  %v211 = vadd.f32 %v59, %v210
  %v212 = vpop.f32.mrb[0].mxu0
  %v213 = vpop.f32.mrb[0].mxu0
  %v214 = vadd.f32 %v59, %v213
  %v215 = vpop.f32.mrb[0].mxu0
  %216 = vmatprep.mubr.bf16.mxu0 0
  %217 = vmatmul.mubr.bf16.gmra.mrb[0].mxu0 %v134
  %v218 = vpop.f32.mrb[0].mxu0
  %v219 = vadd.f32 %v59, %v218
  %v220 = vpop.f32.mrb[0].mxu0
  %v221 = vpop.f32.mrb[0].mxu0
  %v222 = vadd.f32 %v59, %v221
  %v223 = vpop.f32.mrb[0].mxu0
  %224 = vmatprep.mubr.bf16.mxu0 0
  %225 = vmatmul.mubr.bf16.gmra.mrb[0].mxu0 %v137
  %v226 = vpop.f32.mrb[0].mxu0
  %v227 = vadd.f32 %v59, %v226
  %v228 = vpop.f32.mrb[0].mxu0
  %v229 = vpop.f32.mrb[0].mxu0
  %v230 = vadd.f32 %v59, %v229
  %v231 = vpop.f32.mrb[0].mxu0
  %232 = vmatprep.mubr.bf16.mxu0 0
  %233 = vmatmul.mubr.bf16.gmra.mrb[0].mxu0 %v140
  %v234 = vpop.f32.mrb[0].mxu0
  %v235 = vadd.f32 %v59, %v234
  %v236 = vpop.f32.mrb[0].mxu0
  %v237 = vpop.f32.mrb[0].mxu0
  %v238 = vadd.f32 %v59, %v237
  %v239 = vpop.f32.mrb[0].mxu0
  %240 = vmatprep.mubr.bf16.mxu0 0
  %241 = vmatmul.mubr.bf16.gmra.mrb[0].mxu0 %v143
  %v242 = vpop.f32.mrb[0].mxu0
  %v243 = vadd.f32 %v59, %v242
  %v244 = vpop.f32.mrb[0].mxu0
  %v245 = vpop.f32.mrb[0].mxu0
  %v246 = vadd.f32 %v59, %v245
  %v247 = vpop.f32.mrb[0].mxu0
  %248 = vmatprep.mubr.bf16.mxu0 0
  %249 = vmatmul.mubr.bf16.gmra.mrb[0].mxu0 %v146
  %v250 = vpop.f32.mrb[0].mxu0
  %v251 = vadd.f32 %v59, %v250
  %v252 = vpop.f32.mrb[0].mxu0
  %v253 = vpop.f32.mrb[0].mxu0
  %v254 = vadd.f32 %v59, %v253
  %v255 = vpop.f32.mrb[0].mxu0
  %256 = vmatprep.mubr.bf16.mxu0 0
  %257 = vmatmul.mubr.bf16.gmra.mrb[0].mxu0 %v149
  %v258 = vpop.f32.mrb[0].mxu0
  %v259 = vadd.f32 %v59, %v258
  %v260 = vpop.f32.mrb[0].mxu0
  %v261 = vpop.f32.mrb[0].mxu0
  %v262 = vadd.f32 %v59, %v261
  %v263 = vpop.f32.mrb[0].mxu0
  %264 = vmatprep.mubr.bf16.mxu0 0
  %265 = vmatmul.mubr.bf16.gmra.mrb[0].mxu0 %v152
  %v266 = vpop.f32.mrb[0].mxu0
  %v267 = vadd.f32 %v59, %v266
  %v268 = vpop.f32.mrb[0].mxu0
  %v269 = vpop.f32.mrb[0].mxu0
  %v270 = vadd.f32 %v59, %v269
  %v271 = vpop.f32.mrb[0].mxu0
  %272 = vmatprep.mubr.bf16.mxu0 0
  %273 = vmatmul.mubr.bf16.gmra.mrb[0].mxu0 %v155
  %v274 = vpop.f32.mrb[0].mxu0
  %v275 = vadd.f32 %v59, %v274
  %v276 = vpop.f32.mrb[0].mxu0
  %v277 = vpop.f32.mrb[0].mxu0
  %v278 = vadd.f32 %v59, %v277
  %v279 = vpop.f32.mrb[0].mxu0
  %280 = vmatprep.mubr.bf16.mxu0 0
  %281 = vmatmul.mubr.bf16.gmra.mrb[0].mxu0 %v158
  %v282 = vpop.f32.mrb[0].mxu0
  %v283 = vadd.f32 %v59, %v282
  %v284 = vpop.f32.mrb[0].mxu0
  %v285 = vpop.f32.mrb[0].mxu0
  %v286 = vadd.f32 %v59, %v285
  %v287 = vpop.f32.mrb[0].mxu0
  %288 = vmatprep.mubr.bf16.mxu0 0
  %289 = vmatmul.mubr.bf16.gmra.mrb[0].mxu0 %v161
  %v290 = vpop.f32.mrb[0].mxu0
  %v291 = vadd.f32 %v59, %v290
  %v292 = vpop.f32.mrb[0].mxu0
  %v293 = vpop.f32.mrb[0].mxu0
  %v294 = vadd.f32 %v59, %v293
  %v295 = vpop.f32.mrb[0].mxu0
  %296 = vmatprep.mubr.bf16.mxu0 0
  %297 = vmatmul.mubr.bf16.gmra.mrb[0].mxu0 %v164
  %v298 = vpop.f32.mrb[0].mxu0
  %v299 = vadd.f32 %v59, %v298
  %v300 = vpop.f32.mrb[0].mxu0
  %v301 = vpop.f32.mrb[0].mxu0
  %v302 = vadd.f32 %v59, %v301
  %v303 = vpop.f32.mrb[0].mxu0
  %304 = vmatprep.mubr.bf16.mxu0 0
  %305 = vmatmul.mubr.bf16.gmra.mrb[0].mxu0 %v167
  %v306 = vpop.f32.mrb[0].mxu0
  %v307 = vadd.f32 %v59, %v306
  %v308 = vpop.f32.mrb[0].mxu0
  %v309 = vpop.f32.mrb[0].mxu0
  %v310 = vpop.f32.mrb[0].mxu0
  %311 = vdwg.mxu0
  %v312 = vmax.f32 %v211, 0.0
  %v313 = vmax.f32 %v214, 0.0
  %v314 = vmax.f32 %v219, 0.0
  %v315 = vmax.f32 %v222, 0.0
  %v316 = vmax.f32 %v227, 0.0
  %v317 = vmax.f32 %v230, 0.0
  %v318 = vmax.f32 %v235, 0.0
  %v319 = vmax.f32 %v238, 0.0
  %v320 = vmax.f32 %v243, 0.0
  %v321 = vmax.f32 %v246, 0.0
  %v322 = vmax.f32 %v251, 0.0
  %v323 = vmax.f32 %v254, 0.0
  %v324 = vmax.f32 %v259, 0.0
  %v325 = vmax.f32 %v262, 0.0
  %v326 = vmax.f32 %v267, 0.0
  %v327 = vmax.f32 %v270, 0.0
  %v328 = vmax.f32 %v275, 0.0
  %v329 = vmax.f32 %v278, 0.0
  %v330 = vmax.f32 %v283, 0.0
  %v331 = vmax.f32 %v286, 0.0
  %v332 = vmax.f32 %v291, 0.0
  %v333 = vmax.f32 %v294, 0.0
  %v334 = vmax.f32 %v299, 0.0
  %v335 = vmax.f32 %v302, 0.0
  %v336 = vmax.f32 %v307, 0.0
  %v337 = vpack.c.bf16 %v313, %v312
  %v338 = vpack.c.bf16 %v315, %v314
  %v339 = vpack.c.bf16 %v317, %v316
  %v340 = vpack.c.bf16 %v319, %v318
  %v341 = vpack.c.bf16 %v321, %v320
  %v342 = vpack.c.bf16 %v323, %v322
  %v343 = vpack.c.bf16 %v325, %v324
  %v344 = vpack.c.bf16 %v327, %v326
  %v345 = vpack.c.bf16 %v329, %v328
  %v346 = vpack.c.bf16 %v331, %v330
  %v347 = vpack.c.bf16 %v333, %v332
  %v348 = vpack.c.bf16 %v335, %v334
  %v349 = vpack.c.bf16 %v336, %v336
  %v350 = vld [vmem:[%s3] sm:$0xf]
  %v351 = vld [vmem:[%s3 + $0x4] sm:$0xf]
  %v352 = vld [vmem:[%s3 + $0x8] sm:$0xf]
  %v353 = vld [vmem:[%s3 + $0xc] sm:$0xf]
  %v354 = vld [vmem:[%s4] sm:$0x1]
  %v356 = vlaneseq
  %v357 = vshrl.u32 %v356, 7
  %v358 = vsub.s32 0, %v357
  %v359 = vrot.slane %v354, %v358
  %v365 = vunpack.c.l.b16 %v350
  %v366 = vunpack.c.l.b16 %v351
  %v367 = vunpack.c.l.b16 %v352
  %v368 = vunpack.c.l.b16 %v353
  %v369 = vpack.c.b16 %v366, %v365
  %v370 = vpack.c.b16 %v368, %v367
  %vm373 = vcmask 261120
  %v375 = vsel %vm373, %v337, 0
  %v378 = vsel %vm373, %v338, 0
  %v381 = vsel %vm373, %v339, 0
  %v384 = vsel %vm373, %v340, 0
  %v387 = vsel %vm373, %v341, 0
  %v390 = vsel %vm373, %v342, 0
  %v393 = vsel %vm373, %v343, 0
  %v396 = vsel %vm373, %v344, 0
  %v399 = vsel %vm373, %v345, 0
  %v402 = vsel %vm373, %v346, 0
  %v405 = vsel %vm373, %v347, 0
  %v408 = vsel %vm373, %v348, 0
  %v411 = vsel %vm373, %v349, 0
  %413 = vmatprep.subr.bf16.mxu0 0
  %414 = vmatpush1.bf16.msra.mxu0 %v369
  %415 = vmatprep.subr.bf16.mxu0 0
  %416 = vmatpush1.bf16.msra.mxu0 %v370
  %417 = vmatprep.subr.bf16.mxu0 0
  %418 = vmatpush1.bf16.msra.mxu0 0
  %419 = vmatprep.subr.bf16.mxu0 0
  %420 = vmatpush1.bf16.msra.mxu0 0
  %421 = vmatprep.subr.bf16.mxu0 0
  %422 = vmatpush1.bf16.msra.mxu0 0
  %423 = vmatprep.subr.bf16.mxu0 0
  %424 = vmatpush1.bf16.msra.mxu0 0
  %425 = vmatprep.subr.bf16.mxu0 0
  %426 = vmatpush1.bf16.msra.mxu0 0
  %427 = vmatprep.subr.bf16.mxu0 0
  %428 = vmatpush1.bf16.msra.mxu0 0
  %429 = vmatprep.subr.bf16.mxu0 0
  %430 = vmatpush1.bf16.msra.mxu0 0
  %431 = vmatprep.subr.bf16.mxu0 0
  %432 = vmatpush1.bf16.msra.mxu0 0
  %433 = vmatprep.subr.bf16.mxu0 0
  %434 = vmatpush1.bf16.msra.mxu0 0
  %435 = vmatprep.subr.bf16.mxu0 0
  %436 = vmatpush1.bf16.msra.mxu0 0
  %437 = vmatprep.subr.bf16.mxu0 0
  %438 = vmatpush1.bf16.msra.mxu0 0
  %439 = vmatprep.subr.bf16.mxu0 0
  %440 = vmatpush1.bf16.msra.mxu0 0
  %441 = vmatprep.subr.bf16.mxu0 0
  %442 = vmatpush1.bf16.msra.mxu0 0
  %443 = vmatprep.subr.bf16.mxu0 0
  %444 = vmatpush1.bf16.msra.mxu0 0
  %445 = vmatprep.mubr.bf16.mxu0 0
  %446 = vmatmul.mubr.bf16.gmra.mrb[0].mxu0 %v375
  %v447 = vpop.f32.mrb[0].mxu0
  %v448 = vadd.f32 %v359, %v447
  %v449 = vpop.f32.mrb[0].mxu0
  %v450 = vpop.f32.mrb[0].mxu0
  %v451 = vadd.f32 %v359, %v450
  %v452 = vpop.f32.mrb[0].mxu0
  %453 = vmatprep.mubr.bf16.mxu0 0
  %454 = vmatmul.mubr.bf16.gmra.mrb[0].mxu0 %v378
  %v455 = vpop.f32.mrb[0].mxu0
  %v456 = vadd.f32 %v359, %v455
  %v457 = vpop.f32.mrb[0].mxu0
  %v458 = vpop.f32.mrb[0].mxu0
  %v459 = vadd.f32 %v359, %v458
  %v460 = vpop.f32.mrb[0].mxu0
  %461 = vmatprep.mubr.bf16.mxu0 0
  %462 = vmatmul.mubr.bf16.gmra.mrb[0].mxu0 %v381
  %v463 = vpop.f32.mrb[0].mxu0
  %v464 = vadd.f32 %v359, %v463
  %v465 = vpop.f32.mrb[0].mxu0
  %v466 = vpop.f32.mrb[0].mxu0
  %v467 = vadd.f32 %v359, %v466
  %v468 = vpop.f32.mrb[0].mxu0
  %469 = vmatprep.mubr.bf16.mxu0 0
  %470 = vmatmul.mubr.bf16.gmra.mrb[0].mxu0 %v384
  %v471 = vpop.f32.mrb[0].mxu0
  %v472 = vadd.f32 %v359, %v471
  %v473 = vpop.f32.mrb[0].mxu0
  %v474 = vpop.f32.mrb[0].mxu0
  %v475 = vadd.f32 %v359, %v474
  %v476 = vpop.f32.mrb[0].mxu0
  %477 = vmatprep.mubr.bf16.mxu0 0
  %478 = vmatmul.mubr.bf16.gmra.mrb[0].mxu0 %v387
  %v479 = vpop.f32.mrb[0].mxu0
  %v480 = vadd.f32 %v359, %v479
  %v481 = vpop.f32.mrb[0].mxu0
  %v482 = vpop.f32.mrb[0].mxu0
  %v483 = vadd.f32 %v359, %v482
  %v484 = vpop.f32.mrb[0].mxu0
  %485 = vmatprep.mubr.bf16.mxu0 0
  %486 = vmatmul.mubr.bf16.gmra.mrb[0].mxu0 %v390
  %v487 = vpop.f32.mrb[0].mxu0
  %v488 = vadd.f32 %v359, %v487
  %v489 = vpop.f32.mrb[0].mxu0
  %v490 = vpop.f32.mrb[0].mxu0
  %v491 = vadd.f32 %v359, %v490
  %v492 = vpop.f32.mrb[0].mxu0
  %493 = vmatprep.mubr.bf16.mxu0 0
  %494 = vmatmul.mubr.bf16.gmra.mrb[0].mxu0 %v393
  %v495 = vpop.f32.mrb[0].mxu0
  %v496 = vadd.f32 %v359, %v495
  %v497 = vpop.f32.mrb[0].mxu0
  %v498 = vpop.f32.mrb[0].mxu0
  %v499 = vadd.f32 %v359, %v498
  %v500 = vpop.f32.mrb[0].mxu0
  %501 = vmatprep.mubr.bf16.mxu0 0
  %502 = vmatmul.mubr.bf16.gmra.mrb[0].mxu0 %v396
  %v503 = vpop.f32.mrb[0].mxu0
  %v504 = vadd.f32 %v359, %v503
  %v505 = vpop.f32.mrb[0].mxu0
  %v506 = vpop.f32.mrb[0].mxu0
  %v507 = vadd.f32 %v359, %v506
  %v508 = vpop.f32.mrb[0].mxu0
  %509 = vmatprep.mubr.bf16.mxu0 0
  %510 = vmatmul.mubr.bf16.gmra.mrb[0].mxu0 %v399
  %v511 = vpop.f32.mrb[0].mxu0
  %v512 = vadd.f32 %v359, %v511
  %v513 = vpop.f32.mrb[0].mxu0
  %v514 = vpop.f32.mrb[0].mxu0
  %v515 = vadd.f32 %v359, %v514
  %v516 = vpop.f32.mrb[0].mxu0
  %517 = vmatprep.mubr.bf16.mxu0 0
  %518 = vmatmul.mubr.bf16.gmra.mrb[0].mxu0 %v402
  %v519 = vpop.f32.mrb[0].mxu0
  %v520 = vadd.f32 %v359, %v519
  %v521 = vpop.f32.mrb[0].mxu0
  %v522 = vpop.f32.mrb[0].mxu0
  %v523 = vadd.f32 %v359, %v522
  %v524 = vpop.f32.mrb[0].mxu0
  %525 = vmatprep.mubr.bf16.mxu0 0
  %526 = vmatmul.mubr.bf16.gmra.mrb[0].mxu0 %v405
  %v527 = vpop.f32.mrb[0].mxu0
  %v528 = vadd.f32 %v359, %v527
  %v529 = vpop.f32.mrb[0].mxu0
  %v530 = vpop.f32.mrb[0].mxu0
  %v531 = vadd.f32 %v359, %v530
  %v532 = vpop.f32.mrb[0].mxu0
  %533 = vmatprep.mubr.bf16.mxu0 0
  %534 = vmatmul.mubr.bf16.gmra.mrb[0].mxu0 %v408
  %v535 = vpop.f32.mrb[0].mxu0
  %v536 = vadd.f32 %v359, %v535
  %v537 = vpop.f32.mrb[0].mxu0
  %v538 = vpop.f32.mrb[0].mxu0
  %v539 = vadd.f32 %v359, %v538
  %v540 = vpop.f32.mrb[0].mxu0
  %541 = vmatprep.mubr.bf16.mxu0 0
  %542 = vmatmul.mubr.bf16.gmra.mrb[0].mxu0 %v411
  %v543 = vpop.f32.mrb[0].mxu0
  %v544 = vadd.f32 %v359, %v543
  %v545 = vpop.f32.mrb[0].mxu0
  %v546 = vpop.f32.mrb[0].mxu0
  %v547 = vpop.f32.mrb[0].mxu0
  %548 = vdwg.mxu0
  %v549 = vmax.f32 %v448, 0.0
  %v550 = vmax.f32 %v451, 0.0
  %v551 = vmax.f32 %v456, 0.0
  %v552 = vmax.f32 %v459, 0.0
  %v553 = vmax.f32 %v464, 0.0
  %v554 = vmax.f32 %v467, 0.0
  %v555 = vmax.f32 %v472, 0.0
  %v556 = vmax.f32 %v475, 0.0
  %v557 = vmax.f32 %v480, 0.0
  %v558 = vmax.f32 %v483, 0.0
  %v559 = vmax.f32 %v488, 0.0
  %v560 = vmax.f32 %v491, 0.0
  %v561 = vmax.f32 %v496, 0.0
  %v562 = vmax.f32 %v499, 0.0
  %v563 = vmax.f32 %v504, 0.0
  %v564 = vmax.f32 %v507, 0.0
  %v565 = vmax.f32 %v512, 0.0
  %v566 = vmax.f32 %v515, 0.0
  %v567 = vmax.f32 %v520, 0.0
  %v568 = vmax.f32 %v523, 0.0
  %v569 = vmax.f32 %v528, 0.0
  %v570 = vmax.f32 %v531, 0.0
  %v571 = vmax.f32 %v536, 0.0
  %v572 = vmax.f32 %v539, 0.0
  %v573 = vmax.f32 %v544, 0.0
  %v574 = vpack.c.bf16 %v550, %v549
  %v575 = vpack.c.bf16 %v552, %v551
  %v576 = vpack.c.bf16 %v554, %v553
  %v577 = vpack.c.bf16 %v556, %v555
  %v578 = vpack.c.bf16 %v558, %v557
  %v579 = vpack.c.bf16 %v560, %v559
  %v580 = vpack.c.bf16 %v562, %v561
  %v581 = vpack.c.bf16 %v564, %v563
  %v582 = vpack.c.bf16 %v566, %v565
  %v583 = vpack.c.bf16 %v568, %v567
  %v584 = vpack.c.bf16 %v570, %v569
  %v585 = vpack.c.bf16 %v572, %v571
  %v586 = vpack.c.bf16 %v573, %v573
  %v587 = vld [vmem:[%s5] sm:$0xf]
  %v588 = vld [vmem:[%s5 + $0x4] sm:$0xf]
  %v589 = vld [vmem:[%s5 + $0x8] sm:$0xf]
  %v590 = vld [vmem:[%s5 + $0xc] sm:$0xf]
  %v591 = vld [vmem:[%s6] sm:$0x1]
  %v593 = vlaneseq
  %v594 = vshrl.u32 %v593, 7
  %v595 = vsub.s32 0, %v594
  %v596 = vrot.slane %v591, %v595
  %v602 = vunpack.c.l.b16 %v587
  %v603 = vunpack.c.l.b16 %v588
  %v604 = vunpack.c.l.b16 %v589
  %v605 = vunpack.c.l.b16 %v590
  %v606 = vpack.c.b16 %v603, %v602
  %v607 = vpack.c.b16 %v605, %v604
  %v611 = vsel %vm373, %v574, 0
  %v614 = vsel %vm373, %v575, 0
  %v617 = vsel %vm373, %v576, 0
  %v620 = vsel %vm373, %v577, 0
  %v623 = vsel %vm373, %v578, 0
  %v626 = vsel %vm373, %v579, 0
  %v629 = vsel %vm373, %v580, 0
  %v632 = vsel %vm373, %v581, 0
  %v635 = vsel %vm373, %v582, 0
  %v638 = vsel %vm373, %v583, 0
  %v641 = vsel %vm373, %v584, 0
  %v644 = vsel %vm373, %v585, 0
  %v647 = vsel %vm373, %v586, 0
  %649 = vmatprep.subr.bf16.mxu0 0
  %650 = vmatpush1.bf16.msra.mxu0 %v606
  %651 = vmatprep.subr.bf16.mxu0 0
  %652 = vmatpush1.bf16.msra.mxu0 %v607
  %653 = vmatprep.subr.bf16.mxu0 0
  %654 = vmatpush1.bf16.msra.mxu0 0
  %655 = vmatprep.subr.bf16.mxu0 0
  %656 = vmatpush1.bf16.msra.mxu0 0
  %657 = vmatprep.subr.bf16.mxu0 0
  %658 = vmatpush1.bf16.msra.mxu0 0
  %659 = vmatprep.subr.bf16.mxu0 0
  %660 = vmatpush1.bf16.msra.mxu0 0
  %661 = vmatprep.subr.bf16.mxu0 0
  %662 = vmatpush1.bf16.msra.mxu0 0
  %663 = vmatprep.subr.bf16.mxu0 0
  %664 = vmatpush1.bf16.msra.mxu0 0
  %665 = vmatprep.subr.bf16.mxu0 0
  %666 = vmatpush1.bf16.msra.mxu0 0
  %667 = vmatprep.subr.bf16.mxu0 0
  %668 = vmatpush1.bf16.msra.mxu0 0
  %669 = vmatprep.subr.bf16.mxu0 0
  %670 = vmatpush1.bf16.msra.mxu0 0
  %671 = vmatprep.subr.bf16.mxu0 0
  %672 = vmatpush1.bf16.msra.mxu0 0
  %673 = vmatprep.subr.bf16.mxu0 0
  %674 = vmatpush1.bf16.msra.mxu0 0
  %675 = vmatprep.subr.bf16.mxu0 0
  %676 = vmatpush1.bf16.msra.mxu0 0
  %677 = vmatprep.subr.bf16.mxu0 0
  %678 = vmatpush1.bf16.msra.mxu0 0
  %679 = vmatprep.subr.bf16.mxu0 0
  %680 = vmatpush1.bf16.msra.mxu0 0
  %681 = vmatprep.mubr.bf16.mxu0 0
  %682 = vmatmul.mubr.bf16.gmra.mrb[0].mxu0 %v611
  %v683 = vpop.f32.mrb[0].mxu0
  %v684 = vadd.f32 %v596, %v683
  %v685 = vpop.f32.mrb[0].mxu0
  %v686 = vpop.f32.mrb[0].mxu0
  %v687 = vadd.f32 %v596, %v686
  %v688 = vpop.f32.mrb[0].mxu0
  %689 = vmatprep.mubr.bf16.mxu0 0
  %690 = vmatmul.mubr.bf16.gmra.mrb[0].mxu0 %v614
  %v691 = vpop.f32.mrb[0].mxu0
  %v692 = vadd.f32 %v596, %v691
  %v693 = vpop.f32.mrb[0].mxu0
  %v694 = vpop.f32.mrb[0].mxu0
  %v695 = vadd.f32 %v596, %v694
  %v696 = vpop.f32.mrb[0].mxu0
  %697 = vmatprep.mubr.bf16.mxu0 0
  %698 = vmatmul.mubr.bf16.gmra.mrb[0].mxu0 %v617
  %v699 = vpop.f32.mrb[0].mxu0
  %v700 = vadd.f32 %v596, %v699
  %v701 = vpop.f32.mrb[0].mxu0
  %v702 = vpop.f32.mrb[0].mxu0
  %v703 = vadd.f32 %v596, %v702
  %v704 = vpop.f32.mrb[0].mxu0
  %705 = vmatprep.mubr.bf16.mxu0 0
  %706 = vmatmul.mubr.bf16.gmra.mrb[0].mxu0 %v620
  %v707 = vpop.f32.mrb[0].mxu0
  %v708 = vadd.f32 %v596, %v707
  %v709 = vpop.f32.mrb[0].mxu0
  %v710 = vpop.f32.mrb[0].mxu0
  %v711 = vadd.f32 %v596, %v710
  %v712 = vpop.f32.mrb[0].mxu0
  %713 = vmatprep.mubr.bf16.mxu0 0
  %714 = vmatmul.mubr.bf16.gmra.mrb[0].mxu0 %v623
  %v715 = vpop.f32.mrb[0].mxu0
  %v716 = vadd.f32 %v596, %v715
  %v717 = vpop.f32.mrb[0].mxu0
  %v718 = vpop.f32.mrb[0].mxu0
  %v719 = vadd.f32 %v596, %v718
  %v720 = vpop.f32.mrb[0].mxu0
  %721 = vmatprep.mubr.bf16.mxu0 0
  %722 = vmatmul.mubr.bf16.gmra.mrb[0].mxu0 %v626
  %v723 = vpop.f32.mrb[0].mxu0
  %v724 = vadd.f32 %v596, %v723
  %v725 = vpop.f32.mrb[0].mxu0
  %v726 = vpop.f32.mrb[0].mxu0
  %v727 = vadd.f32 %v596, %v726
  %v728 = vpop.f32.mrb[0].mxu0
  %729 = vmatprep.mubr.bf16.mxu0 0
  %730 = vmatmul.mubr.bf16.gmra.mrb[0].mxu0 %v629
  %v731 = vpop.f32.mrb[0].mxu0
  %v732 = vadd.f32 %v596, %v731
  %v733 = vpop.f32.mrb[0].mxu0
  %v734 = vpop.f32.mrb[0].mxu0
  %v735 = vadd.f32 %v596, %v734
  %v736 = vpop.f32.mrb[0].mxu0
  %737 = vmatprep.mubr.bf16.mxu0 0
  %738 = vmatmul.mubr.bf16.gmra.mrb[0].mxu0 %v632
  %v739 = vpop.f32.mrb[0].mxu0
  %v740 = vadd.f32 %v596, %v739
  %v741 = vpop.f32.mrb[0].mxu0
  %v742 = vpop.f32.mrb[0].mxu0
  %v743 = vadd.f32 %v596, %v742
  %v744 = vpop.f32.mrb[0].mxu0
  %745 = vmatprep.mubr.bf16.mxu0 0
  %746 = vmatmul.mubr.bf16.gmra.mrb[0].mxu0 %v635
  %v747 = vpop.f32.mrb[0].mxu0
  %v748 = vadd.f32 %v596, %v747
  %v749 = vpop.f32.mrb[0].mxu0
  %v750 = vpop.f32.mrb[0].mxu0
  %v751 = vadd.f32 %v596, %v750
  %v752 = vpop.f32.mrb[0].mxu0
  %753 = vmatprep.mubr.bf16.mxu0 0
  %754 = vmatmul.mubr.bf16.gmra.mrb[0].mxu0 %v638
  %v755 = vpop.f32.mrb[0].mxu0
  %v756 = vadd.f32 %v596, %v755
  %v757 = vpop.f32.mrb[0].mxu0
  %v758 = vpop.f32.mrb[0].mxu0
  %v759 = vadd.f32 %v596, %v758
  %v760 = vpop.f32.mrb[0].mxu0
  %761 = vmatprep.mubr.bf16.mxu0 0
  %762 = vmatmul.mubr.bf16.gmra.mrb[0].mxu0 %v641
  %v763 = vpop.f32.mrb[0].mxu0
  %v764 = vadd.f32 %v596, %v763
  %v765 = vpop.f32.mrb[0].mxu0
  %v766 = vpop.f32.mrb[0].mxu0
  %v767 = vadd.f32 %v596, %v766
  %v768 = vpop.f32.mrb[0].mxu0
  %769 = vmatprep.mubr.bf16.mxu0 0
  %770 = vmatmul.mubr.bf16.gmra.mrb[0].mxu0 %v644
  %v771 = vpop.f32.mrb[0].mxu0
  %v772 = vadd.f32 %v596, %v771
  %v773 = vpop.f32.mrb[0].mxu0
  %v774 = vpop.f32.mrb[0].mxu0
  %v775 = vadd.f32 %v596, %v774
  %v776 = vpop.f32.mrb[0].mxu0
  %777 = vmatprep.mubr.bf16.mxu0 0
  %778 = vmatmul.mubr.bf16.gmra.mrb[0].mxu0 %v647
  %v779 = vpop.f32.mrb[0].mxu0
  %v780 = vadd.f32 %v596, %v779
  %v781 = vpop.f32.mrb[0].mxu0
  %v782 = vpop.f32.mrb[0].mxu0
  %v783 = vpop.f32.mrb[0].mxu0
  %784 = vdwg.mxu0
  %vm785 = vcmask 23552
  %786 = vst.msk [vmem:[%s7] sm:$0xff] %vm785, %v684
  %787 = vst.msk [vmem:[%s7 + $0x8] sm:$0xff] %vm785, %v687
  %788 = vst.msk [vmem:[%s7 + $0x10] sm:$0xff] %vm785, %v692
  %789 = vst.msk [vmem:[%s7 + $0x18] sm:$0xff] %vm785, %v695
  %790 = vst.msk [vmem:[%s7 + $0x20] sm:$0xff] %vm785, %v700
  %791 = vst.msk [vmem:[%s7 + $0x28] sm:$0xff] %vm785, %v703
  %792 = vst.msk [vmem:[%s7 + $0x30] sm:$0xff] %vm785, %v708
  %793 = vst.msk [vmem:[%s7 + $0x38] sm:$0xff] %vm785, %v711
  %794 = vst.msk [vmem:[%s7 + $0x40] sm:$0xff] %vm785, %v716
  %795 = vst.msk [vmem:[%s7 + $0x48] sm:$0xff] %vm785, %v719
  %796 = vst.msk [vmem:[%s7 + $0x50] sm:$0xff] %vm785, %v724
  %797 = vst.msk [vmem:[%s7 + $0x58] sm:$0xff] %vm785, %v727
  %798 = vst.msk [vmem:[%s7 + $0x60] sm:$0xff] %vm785, %v732
  %799 = vst.msk [vmem:[%s7 + $0x68] sm:$0xff] %vm785, %v735
  %800 = vst.msk [vmem:[%s7 + $0x70] sm:$0xff] %vm785, %v740
  %801 = vst.msk [vmem:[%s7 + $0x78] sm:$0xff] %vm785, %v743
  %802 = vst.msk [vmem:[%s7 + $0x80] sm:$0xff] %vm785, %v748
  %803 = vst.msk [vmem:[%s7 + $0x88] sm:$0xff] %vm785, %v751
  %804 = vst.msk [vmem:[%s7 + $0x90] sm:$0xff] %vm785, %v756
  %805 = vst.msk [vmem:[%s7 + $0x98] sm:$0xff] %vm785, %v759
  %806 = vst.msk [vmem:[%s7 + $0xa0] sm:$0xff] %vm785, %v764
  %807 = vst.msk [vmem:[%s7 + $0xa8] sm:$0xff] %vm785, %v767
  %808 = vst.msk [vmem:[%s7 + $0xb0] sm:$0xff] %vm785, %v772
  %809 = vst.msk [vmem:[%s7 + $0xb8] sm:$0xff] %vm785, %v775
  %810 = vst.msk [vmem:[%s7 + $0xc0] sm:$0xff] %vm785, %v780
  // Predicated region
  $region30: #{tpu_custom_call.1} parent=0 // pred_check
    _
  $region31: #{tpu_custom_call.1} parent=0 // pred_check_branch
    %812 = sbr.rel (0) target = $region33
  $region32: #{tpu_custom_call.1} parent=0 // pred_region
    _
  $region33: #{tpu_custom_call.1} parent=0 // pred_fallthru
    _
  // Predicated region
  $region34: #{tpu_custom_call.1} parent=0 // pred_check
    _
  $region35: #{tpu_custom_call.1} parent=0 // pred_check_branch
    %814 = sbr.rel (0) target = $region37
  $region36: #{tpu_custom_call.1} parent=0 // pred_region
    _
  $region37: #{tpu_custom_call.1} parent=0 // pred_fallthru
    _

</llo_original>
